<compile_context>
chip_gen: v5e
topology: v5e:2x2
jax: 0.10.0
libtpu: 0.0.40
codegen_flags: <defaults>
</compile_context>

<pallas_src>
import functools

import jax
import jax.numpy as jnp
from jax import lax
from jax.experimental import pallas as pl
from jax.experimental.pallas import tpu as pltpu

LANES = 128
SUBLANES = 8
CHUNK = SUBLANES * LANES  # elements per (8, 128) vreg chunk


def _dice_kernel(p_ref, l_ref, o_ref, tl_ref, t_ref, lsum_ref, *,
                 n, block_rows, blocks_per_split, chunks, unroll):
    """Accumulates Σ tanh(x/2)·l, Σ tanh(x/2), Σ l over one (block_rows, 128)
    tile into three (8, 128) VMEM accumulators (register-resident hot loop)."""
    s = pl.program_id(0)   # TensorCore split (core-parallel on v7x)
    i = pl.program_id(1)   # row-block within split (reduction axis)

    @pl.when(i == 0)
    def _():
        tl_ref[...] = jnp.zeros_like(tl_ref)
        t_ref[...] = jnp.zeros_like(t_ref)
        lsum_ref[...] = jnp.zeros_like(lsum_ref)

    # Global element range this tile claims (pre-clamp block id).  Tiles that
    # extend past n (ragged tail / clamped overflow tiles) take the masked path.
    blk = s * blocks_per_split + i
    start_elem = blk * (block_rows * LANES)
    end_elem = start_elem + block_rows * LANES

    zero = jnp.zeros((SUBLANES, LANES), jnp.float32)

    def flush(acc):
        acc_tl, acc_t, acc_l = acc
        tl_ref[...] += acc_tl
        t_ref[...] += acc_t
        lsum_ref[...] += acc_l

    @pl.when(end_elem <= n)
    def _():
        # Hot path: fully-valid tile.  Pure per-vreg streaming — load, tanh
        # (EUP), one multiply, three adds; everything stays in registers.
        def body(j, acc):
            acc_tl, acc_t, acc_l = acc
            r = pl.multiple_of(j * SUBLANES, SUBLANES)
            x = p_ref[pl.ds(r, SUBLANES), :].astype(jnp.float32)
            lab = l_ref[pl.ds(r, SUBLANES), :].astype(jnp.float32)
            t = jnp.tanh(0.5 * x)          # sigmoid = 0.5*(1+t), applied later
            return (acc_tl + t * lab, acc_t + t, acc_l + lab)

        flush(lax.fori_loop(0, chunks, body, (zero, zero, zero),
                            unroll=unroll))

    @pl.when(end_elem > n)
    def _():
        # Tail / clamped-overflow tile: per-chunk mask by global flat index
        # (padding / out-of-range data may be garbage; select does not
        # propagate it).
        row_idx = lax.broadcasted_iota(jnp.int32, (SUBLANES, LANES), 0)
        col_idx = lax.broadcasted_iota(jnp.int32, (SUBLANES, LANES), 1)
        base = start_elem + row_idx * LANES + col_idx

        def body(j, acc):
            acc_tl, acc_t, acc_l = acc
            r = pl.multiple_of(j * SUBLANES, SUBLANES)
            valid = (base + j * CHUNK) < n
            x = p_ref[pl.ds(r, SUBLANES), :].astype(jnp.float32)
            lab = l_ref[pl.ds(r, SUBLANES), :].astype(jnp.float32)
            t = jnp.where(valid, jnp.tanh(0.5 * x), 0.0)
            lab = jnp.where(valid, lab, 0.0)
            return (acc_tl + t * lab, acc_t + t, acc_l + lab)

        flush(lax.fori_loop(0, chunks, body, (zero, zero, zero),
                            unroll=unroll))

    @pl.when(i == pl.num_programs(1) - 1)
    def _():
        # Dump the (8,128) partial-sum slabs; final reduce happens outside.
        o_ref[0:SUBLANES, :] = tl_ref[...]
        o_ref[SUBLANES:2 * SUBLANES, :] = t_ref[...]
        o_ref[2 * SUBLANES:3 * SUBLANES, :] = lsum_ref[...]


@functools.partial(
    jax.jit, static_argnames=("block_rows", "num_splits", "core_parallel"))
def _dice_loss_impl(predicted_output, label, *, block_rows, num_splits,
                    core_parallel):
    n = predicted_output.size
    pred_flat = predicted_output.reshape(-1)
    label_flat = label.reshape(-1)

    rem = n % LANES
    if rem:
        # Only when numel isn't a multiple of 128 (the 2-D view needs an exact
        # fit); pad contents are masked by the true n inside the kernel.
        pad = LANES - rem
        pred_flat = jnp.pad(pred_flat, (0, pad))
        label_flat = jnp.pad(label_flat, (0, pad))

    rows = pred_flat.shape[0] // LANES
    pred2d = pred_flat.reshape(rows, LANES)
    label2d = label_flat.reshape(rows, LANES)

    # Big lane-dense tiles, capped to the array, multiple of 8 rows.
    br = min(block_rows, pl.cdiv(rows, SUBLANES) * SUBLANES)
    br = max(SUBLANES, (br // SUBLANES) * SUBLANES)
    chunks = br // SUBLANES
    unroll = max(1, min(8, chunks))

    total_blocks = pl.cdiv(rows, br)
    ns = max(1, min(num_splits, total_blocks))
    bps = pl.cdiv(total_blocks, ns)
    last_blk = total_blocks - 1

    def in_map(s, i):
        # Clamp overflow tiles (when total_blocks doesn't divide evenly) onto
        # the last valid block; their contribution is masked to zero in-kernel.
        return (jnp.minimum(s * bps + i, last_blk), 0)

    if ns > 1:
        split_sem = pltpu.CORE_PARALLEL if core_parallel else pltpu.PARALLEL
    else:
        split_sem = pltpu.ARBITRARY

    kernel = functools.partial(
        _dice_kernel, n=n, block_rows=br, blocks_per_split=bps,
        chunks=chunks, unroll=unroll)

    partials = pl.pallas_call(
        kernel,
        out_shape=jax.ShapeDtypeStruct((ns * 3 * SUBLANES, LANES), jnp.float32),
        grid_spec=pltpu.PrefetchScalarGridSpec(
            num_scalar_prefetch=0,
            grid=(ns, bps),
            in_specs=[
                pl.BlockSpec((br, LANES), in_map),
                pl.BlockSpec((br, LANES), in_map),
            ],
            out_specs=pl.BlockSpec((3 * SUBLANES, LANES), lambda s, i: (s, 0)),
            scratch_shapes=[
                pltpu.VMEM((SUBLANES, LANES), jnp.float32),  # sum(t * l)
                pltpu.VMEM((SUBLANES, LANES), jnp.float32),  # sum(t)
                pltpu.VMEM((SUBLANES, LANES), jnp.float32),  # sum(l)
            ],
        ),
        compiler_params=pltpu.CompilerParams(
            dimension_semantics=(split_sem, pltpu.ARBITRARY)),
    )(pred2d, label2d)

    # Final (tiny) cross-lane reduction + dice formula in the wrapper.
    sums = partials.reshape(ns, 3, SUBLANES, LANES).sum(axis=(0, 2, 3))
    tl_sum, t_sum, l_sum = sums[0], sums[1], sums[2]
    # sigmoid(x) = 0.5 * (1 + tanh(x/2)), applied once to the sums:
    p_sum = 0.5 * n + 0.5 * t_sum
    intersect = 0.5 * (l_sum + tl_sum)
    denom = jnp.maximum(p_sum + l_sum, 1e-6)
    loss = 1.0 - 2.0 * (intersect / denom)
    # Match PyTorch: view(1, -1).sum(-1) -> shape (1,)
    return loss.reshape(1)


def _device_kind():
    try:
        return jax.devices()[0].device_kind.lower()
    except Exception:
        return ""


def dice_loss(predicted_output, label, block_rows=None, num_splits=None):
    assert predicted_output.shape == label.shape, (
        "predicted output and label must have the same dimensions")

    kind = _device_kind()
    two_cores = "v7" in kind                       # v7x: 2 TensorCores / chip
    small_vmem = "v5e" in kind or "v5 lite" in kind or "v5lite" in kind

    # Size the tile against the scoped-VMEM budget (double-buffered inputs),
    # leaving headroom for output / scratch:  ~16 MiB scoped on v5e, 32 MiB on
    # v6e/v7x (v7x physical is 64 MiB per TC — stay well under it).
    itemsize = (jnp.dtype(predicted_output.dtype).itemsize
                + jnp.dtype(label.dtype).itemsize)
    budget = (10 << 20) if small_vmem else (22 << 20)
    vmem_rows = max(SUBLANES,
                    (budget // (2 * LANES * itemsize)) // SUBLANES * SUBLANES)

    if block_rows is None:
        block_rows = min(4096 if small_vmem else 8192, vmem_rows)
    if num_splits is None:
        num_splits = 2 if two_cores else 1

    return _dice_loss_impl(predicted_output, label,
                           block_rows=int(block_rows),
                           num_splits=int(num_splits),
                           core_parallel=bool(two_cores))


def _dice_loss_ref(predicted_output, label):
    p = jax.nn.sigmoid(predicted_output.astype(jnp.float32)).reshape(1, -1)
    l = label.astype(jnp.float32).reshape(1, -1)
    intersect = (p * l).sum(-1)
    denominator = jnp.maximum(p.sum(-1) + l.sum(-1), 1e-6)
    return 1.0 - 2.0 * (intersect / denominator)


if __name__ == "__main__":
    key = jax.random.PRNGKey(0)
    k1, k2, k3, k4, k5, k6 = jax.random.split(key, 6)

    # Segmentation-head style NCHW logits + binary mask.  Label kept in bf16:
    # 0/1 is exact and it halves that operand's HBM traffic.
    pred = jax.random.normal(k1, (2, 4, 16, 16), dtype=jnp.float32)
    label = jax.random.bernoulli(k2, 0.3, (2, 4, 16, 16)).astype(jnp.bfloat16)
    out = jax.block_until_ready(dice_loss(pred, label))
    ref = _dice_loss_ref(pred, label)
    assert out.shape == (1,), out.shape
    assert jnp.allclose(out, ref, atol=1e-5, rtol=1e-5), (out, ref)

    # Ragged shape (numel not a multiple of 128) exercises the in-kernel mask.
    pred_r = jax.random.normal(k3, (3, 5, 7, 11), dtype=jnp.float32)
    label_r = jax.random.bernoulli(k4, 0.4, (3, 5, 7, 11)).astype(jnp.float32)
    out_r = jax.block_until_ready(dice_loss(pred_r, label_r))
    ref_r = _dice_loss_ref(pred_r, label_r)
    assert jnp.allclose(out_r, ref_r, atol=1e-5, rtol=1e-5), (out_r, ref_r)

    # Small block_rows + 2 splits exercises multi-block accumulation, the
    # split axis and the epilogue combine.
    pred_m = jax.random.normal(k5, (2, 4, 32, 128), dtype=jnp.float32)
    label_m = jax.random.bernoulli(k6, 0.5, (2, 4, 32, 128)).astype(jnp.bfloat16)
    out_m = jax.block_until_ready(
        dice_loss(pred_m, label_m, block_rows=64, num_splits=2))
    ref_m = _dice_loss_ref(pred_m, label_m)
    assert jnp.allclose(out_m, ref_m, atol=1e-5, rtol=1e-5), (out_m, ref_m)

    print("KERNEL_OK")
</pallas_src>

<mosaic_0001>
module attributes {stable_mosaic.version = 11 : i64} {
  func.func @_dice_kernel(%arg0: i32, %arg1: i32, %arg2: memref<16x128xf32, #tpu.memory_space<vmem>>, %arg3: memref<16x128xbf16, #tpu.memory_space<vmem>>, %arg4: memref<24x128xf32, #tpu.memory_space<vmem>>, %arg5: memref<8x128xf32, #tpu.memory_space<vmem>>, %arg6: memref<8x128xf32, #tpu.memory_space<vmem>>, %arg7: memref<8x128xf32, #tpu.memory_space<vmem>>) attributes {dimension_semantics = [#tpu.dimension_semantics<arbitrary>, #tpu.dimension_semantics<arbitrary>], iteration_bounds = array<i64: 1, 1>, scalar_prefetch = 0 : i64, scratch_operands = 3 : i64, tpu.core_type = #tpu.core_type<tc>, window_params = [{transform_indices = @transform_0, window_bounds = array<i64: 16, 128>}, {transform_indices = @transform_1, window_bounds = array<i64: 16, 128>}, {transform_indices = @transform_2, window_bounds = array<i64: 24, 128>}]} {
    %c0_i32 = arith.constant 0 : i32
    %0 = arith.cmpi eq, %arg1, %c0_i32 : i32
    %1 = arith.extui %0 : i1 to i32
    %c0_i32_0 = arith.constant 0 : i32
    %2 = arith.cmpi ne, %1, %c0_i32_0 : i32
    scf.if %2 {
      %cst_8 = arith.constant 0.000000e+00 : f32
      %17 = vector.broadcast %cst_8 : f32 to vector<8x128xf32>
      %c0 = arith.constant 0 : index
      %c0_9 = arith.constant 0 : index
      %18 = vector.load %arg5[%c0, %c0_9] : memref<8x128xf32, #tpu.memory_space<vmem>>, vector<8x128xf32>
      tpu.vector_store %arg5[%c0, %c0_9], %17 {strides = array<i32>} : memref<8x128xf32, #tpu.memory_space<vmem>>, vector<8x128xf32>,
      %cst_10 = arith.constant 0.000000e+00 : f32
      %19 = vector.broadcast %cst_10 : f32 to vector<8x128xf32>
      %c0_11 = arith.constant 0 : index
      %c0_12 = arith.constant 0 : index
      %20 = vector.load %arg6[%c0_11, %c0_12] : memref<8x128xf32, #tpu.memory_space<vmem>>, vector<8x128xf32>
      tpu.vector_store %arg6[%c0_11, %c0_12], %19 {strides = array<i32>} : memref<8x128xf32, #tpu.memory_space<vmem>>, vector<8x128xf32>,
      %cst_13 = arith.constant 0.000000e+00 : f32
      %21 = vector.broadcast %cst_13 : f32 to vector<8x128xf32>
      %c0_14 = arith.constant 0 : index
      %c0_15 = arith.constant 0 : index
      %22 = vector.load %arg7[%c0_14, %c0_15] : memref<8x128xf32, #tpu.memory_space<vmem>>, vector<8x128xf32>
      tpu.vector_store %arg7[%c0_14, %c0_15], %21 {strides = array<i32>} : memref<8x128xf32, #tpu.memory_space<vmem>>, vector<8x128xf32>,
    } else {
    }
    %c1_i32 = arith.constant 1 : i32
    %3 = arith.muli %arg0, %c1_i32 : i32
    %4 = arith.addi %3, %arg1 : i32
    %c2048_i32 = arith.constant 2048 : i32
    %5 = arith.muli %4, %c2048_i32 : i32
    %c2048_i32_1 = arith.constant 2048 : i32
    %6 = arith.addi %5, %c2048_i32_1 : i32
    %cst = arith.constant 0.000000e+00 : f32
    %7 = vector.broadcast %cst : f32 to vector<8x128xf32>
    %c2048_i32_2 = arith.constant 2048 : i32
    %8 = arith.cmpi sle, %6, %c2048_i32_2 : i32
    %9 = arith.extui %8 : i1 to i32
    %c0_i32_3 = arith.constant 0 : i32
    %10 = arith.cmpi ne, %9, %c0_i32_3 : i32
    scf.if %10 {
      %c0_i32_8 = arith.constant 0 : i32
      %c8_i32 = arith.constant 8 : i32
      %17 = arith.muli %c0_i32_8, %c8_i32 : i32
      %18 = tpu.assume_multiple %17, 8 : i32
      %19 = arith.index_cast %18 : i32 to index
      %c0 = arith.constant 0 : index
      %20 = vector.load %arg2[%19, %c0] : memref<16x128xf32, #tpu.memory_space<vmem>>, vector<8x128xf32>
      %21 = arith.index_cast %18 : i32 to index
      %c0_9 = arith.constant 0 : index
      %22 = vector.load %arg3[%21, %c0_9] : memref<16x128xbf16, #tpu.memory_space<vmem>>, vector<8x128xbf16>
      %23 = arith.extf %22 : vector<8x128xbf16> to vector<8x128xf32>
      %cst_10 = arith.constant 5.000000e-01 : f32
      %24 = vector.broadcast %cst_10 : f32 to vector<8x128xf32>
      %25 = arith.mulf %24, %20 : vector<8x128xf32>
      %26 = math.tanh %25 : vector<8x128xf32>
      %27 = arith.mulf %26, %23 : vector<8x128xf32>
      %28 = arith.addf %7, %27 : vector<8x128xf32>
      %29 = arith.addf %7, %26 : vector<8x128xf32>
      %30 = arith.addf %7, %23 : vector<8x128xf32>
      %c1_i32_11 = arith.constant 1 : i32
      %c8_i32_12 = arith.constant 8 : i32
      %31 = arith.muli %c1_i32_11, %c8_i32_12 : i32
      %32 = tpu.assume_multiple %31, 8 : i32
      %33 = arith.index_cast %32 : i32 to index
      %c0_13 = arith.constant 0 : index
      %34 = vector.load %arg2[%33, %c0_13] : memref<16x128xf32, #tpu.memory_space<vmem>>, vector<8x128xf32>
      %35 = arith.index_cast %32 : i32 to index
      %c0_14 = arith.constant 0 : index
      %36 = vector.load %arg3[%35, %c0_14] : memref<16x128xbf16, #tpu.memory_space<vmem>>, vector<8x128xbf16>
      %37 = arith.extf %36 : vector<8x128xbf16> to vector<8x128xf32>
      %cst_15 = arith.constant 5.000000e-01 : f32
      %38 = vector.broadcast %cst_15 : f32 to vector<8x128xf32>
      %39 = arith.mulf %38, %34 : vector<8x128xf32>
      %40 = math.tanh %39 : vector<8x128xf32>
      %41 = arith.mulf %40, %37 : vector<8x128xf32>
      %42 = arith.addf %28, %41 : vector<8x128xf32>
      %43 = arith.addf %29, %40 : vector<8x128xf32>
      %44 = arith.addf %30, %37 : vector<8x128xf32>
      %c2_i32 = arith.constant 2 : i32
      %c0_16 = arith.constant 0 : index
      %c0_17 = arith.constant 0 : index
      %45 = vector.load %arg5[%c0_16, %c0_17] : memref<8x128xf32, #tpu.memory_space<vmem>>, vector<8x128xf32>
      %46 = arith.addf %45, %42 : vector<8x128xf32>
      %c0_18 = arith.constant 0 : index
      %c0_19 = arith.constant 0 : index
      %47 = vector.load %arg5[%c0_18, %c0_19] : memref<8x128xf32, #tpu.memory_space<vmem>>, vector<8x128xf32>
      tpu.vector_store %arg5[%c0_18, %c0_19], %46 {strides = array<i32>} : memref<8x128xf32, #tpu.memory_space<vmem>>, vector<8x128xf32>,
      %c0_20 = arith.constant 0 : index
      %c0_21 = arith.constant 0 : index
      %48 = vector.load %arg6[%c0_20, %c0_21] : memref<8x128xf32, #tpu.memory_space<vmem>>, vector<8x128xf32>
      %49 = arith.addf %48, %43 : vector<8x128xf32>
      %c0_22 = arith.constant 0 : index
      %c0_23 = arith.constant 0 : index
      %50 = vector.load %arg6[%c0_22, %c0_23] : memref<8x128xf32, #tpu.memory_space<vmem>>, vector<8x128xf32>
      tpu.vector_store %arg6[%c0_22, %c0_23], %49 {strides = array<i32>} : memref<8x128xf32, #tpu.memory_space<vmem>>, vector<8x128xf32>,
      %c0_24 = arith.constant 0 : index
      %c0_25 = arith.constant 0 : index
      %51 = vector.load %arg7[%c0_24, %c0_25] : memref<8x128xf32, #tpu.memory_space<vmem>>, vector<8x128xf32>
      %52 = arith.addf %51, %44 : vector<8x128xf32>
      %c0_26 = arith.constant 0 : index
      %c0_27 = arith.constant 0 : index
      %53 = vector.load %arg7[%c0_26, %c0_27] : memref<8x128xf32, #tpu.memory_space<vmem>>, vector<8x128xf32>
      tpu.vector_store %arg7[%c0_26, %c0_27], %52 {strides = array<i32>} : memref<8x128xf32, #tpu.memory_space<vmem>>, vector<8x128xf32>,
    } else {
    }
    %c2048_i32_4 = arith.constant 2048 : i32
    %11 = arith.cmpi sgt, %6, %c2048_i32_4 : i32
    %12 = arith.extui %11 : i1 to i32
    %c0_i32_5 = arith.constant 0 : i32
    %13 = arith.cmpi ne, %12, %c0_i32_5 : i32
    scf.if %13 {
      %17 = tpu.iota {dimensions = array<i32: 0>} : vector<8x128xi32>
      %18 = tpu.iota {dimensions = array<i32: 1>} : vector<8x128xi32>
      %c128_i32 = arith.constant 128 : i32
      %19 = vector.broadcast %c128_i32 : i32 to vector<8x128xi32>
      %20 = arith.muli %17, %19 : vector<8x128xi32>
      %21 = vector.broadcast %5 : i32 to vector<8x128xi32>
      %22 = arith.addi %21, %20 : vector<8x128xi32>
      %23 = arith.addi %22, %18 : vector<8x128xi32>
      %c0_i32_8 = arith.constant 0 : i32
      %c8_i32 = arith.constant 8 : i32
      %24 = arith.muli %c0_i32_8, %c8_i32 : i32
      %25 = tpu.assume_multiple %24, 8 : i32
      %c1024_i32 = arith.constant 1024 : i32
      %26 = arith.muli %c0_i32_8, %c1024_i32 : i32
      %27 = vector.broadcast %26 : i32 to vector<8x128xi32>
      %28 = arith.addi %23, %27 : vector<8x128xi32>
      %c2048_i32_9 = arith.constant 2048 : i32
      %29 = vector.broadcast %c2048_i32_9 : i32 to vector<8x128xi32>
      %30 = arith.cmpi slt, %28, %29 : vector<8x128xi32>
      %31 = arith.index_cast %25 : i32 to index
      %c0 = arith.constant 0 : index
      %32 = vector.load %arg2[%31, %c0] : memref<16x128xf32, #tpu.memory_space<vmem>>, vector<8x128xf32>
      %33 = arith.index_cast %25 : i32 to index
      %c0_10 = arith.constant 0 : index
      %34 = vector.load %arg3[%33, %c0_10] : memref<16x128xbf16, #tpu.memory_space<vmem>>, vector<8x128xbf16>
      %35 = arith.extf %34 : vector<8x128xbf16> to vector<8x128xf32>
      %cst_11 = arith.constant 5.000000e-01 : f32
      %36 = vector.broadcast %cst_11 : f32 to vector<8x128xf32>
      %37 = arith.mulf %36, %32 : vector<8x128xf32>
      %38 = math.tanh %37 : vector<8x128xf32>
      %cst_12 = arith.constant 0.000000e+00 : f32
      %39 = vector.broadcast %cst_12 : f32 to vector<8x128xf32>
      %40 = arith.select %30, %38, %39 : vector<8x128xi1>, vector<8x128xf32>
      %cst_13 = arith.constant 0.000000e+00 : f32
      %41 = vector.broadcast %cst_13 : f32 to vector<8x128xf32>
      %42 = arith.select %30, %35, %41 : vector<8x128xi1>, vector<8x128xf32>
      %43 = arith.mulf %40, %42 : vector<8x128xf32>
      %44 = arith.addf %7, %43 : vector<8x128xf32>
      %45 = arith.addf %7, %40 : vector<8x128xf32>
      %46 = arith.addf %7, %42 : vector<8x128xf32>
      %c1_i32_14 = arith.constant 1 : i32
      %c8_i32_15 = arith.constant 8 : i32
      %47 = arith.muli %c1_i32_14, %c8_i32_15 : i32
      %48 = tpu.assume_multiple %47, 8 : i32
      %c1024_i32_16 = arith.constant 1024 : i32
      %49 = arith.muli %c1_i32_14, %c1024_i32_16 : i32
      %50 = vector.broadcast %49 : i32 to vector<8x128xi32>
      %51 = arith.addi %23, %50 : vector<8x128xi32>
      %c2048_i32_17 = arith.constant 2048 : i32
      %52 = vector.broadcast %c2048_i32_17 : i32 to vector<8x128xi32>
      %53 = arith.cmpi slt, %51, %52 : vector<8x128xi32>
      %54 = arith.index_cast %48 : i32 to index
      %c0_18 = arith.constant 0 : index
      %55 = vector.load %arg2[%54, %c0_18] : memref<16x128xf32, #tpu.memory_space<vmem>>, vector<8x128xf32>
      %56 = arith.index_cast %48 : i32 to index
      %c0_19 = arith.constant 0 : index
      %57 = vector.load %arg3[%56, %c0_19] : memref<16x128xbf16, #tpu.memory_space<vmem>>, vector<8x128xbf16>
      %58 = arith.extf %57 : vector<8x128xbf16> to vector<8x128xf32>
      %cst_20 = arith.constant 5.000000e-01 : f32
      %59 = vector.broadcast %cst_20 : f32 to vector<8x128xf32>
      %60 = arith.mulf %59, %55 : vector<8x128xf32>
      %61 = math.tanh %60 : vector<8x128xf32>
      %cst_21 = arith.constant 0.000000e+00 : f32
      %62 = vector.broadcast %cst_21 : f32 to vector<8x128xf32>
      %63 = arith.select %53, %61, %62 : vector<8x128xi1>, vector<8x128xf32>
      %cst_22 = arith.constant 0.000000e+00 : f32
      %64 = vector.broadcast %cst_22 : f32 to vector<8x128xf32>
      %65 = arith.select %53, %58, %64 : vector<8x128xi1>, vector<8x128xf32>
      %66 = arith.mulf %63, %65 : vector<8x128xf32>
      %67 = arith.addf %44, %66 : vector<8x128xf32>
      %68 = arith.addf %45, %63 : vector<8x128xf32>
      %69 = arith.addf %46, %65 : vector<8x128xf32>
      %c2_i32 = arith.constant 2 : i32
      %c0_23 = arith.constant 0 : index
      %c0_24 = arith.constant 0 : index
      %70 = vector.load %arg5[%c0_23, %c0_24] : memref<8x128xf32, #tpu.memory_space<vmem>>, vector<8x128xf32>
      %71 = arith.addf %70, %67 : vector<8x128xf32>
      %c0_25 = arith.constant 0 : index
      %c0_26 = arith.constant 0 : index
      %72 = vector.load %arg5[%c0_25, %c0_26] : memref<8x128xf32, #tpu.memory_space<vmem>>, vector<8x128xf32>
      tpu.vector_store %arg5[%c0_25, %c0_26], %71 {strides = array<i32>} : memref<8x128xf32, #tpu.memory_space<vmem>>, vector<8x128xf32>,
      %c0_27 = arith.constant 0 : index
      %c0_28 = arith.constant 0 : index
      %73 = vector.load %arg6[%c0_27, %c0_28] : memref<8x128xf32, #tpu.memory_space<vmem>>, vector<8x128xf32>
      %74 = arith.addf %73, %68 : vector<8x128xf32>
      %c0_29 = arith.constant 0 : index
      %c0_30 = arith.constant 0 : index
      %75 = vector.load %arg6[%c0_29, %c0_30] : memref<8x128xf32, #tpu.memory_space<vmem>>, vector<8x128xf32>
      tpu.vector_store %arg6[%c0_29, %c0_30], %74 {strides = array<i32>} : memref<8x128xf32, #tpu.memory_space<vmem>>, vector<8x128xf32>,
      %c0_31 = arith.constant 0 : index
      %c0_32 = arith.constant 0 : index
      %76 = vector.load %arg7[%c0_31, %c0_32] : memref<8x128xf32, #tpu.memory_space<vmem>>, vector<8x128xf32>
      %77 = arith.addf %76, %69 : vector<8x128xf32>
      %c0_33 = arith.constant 0 : index
      %c0_34 = arith.constant 0 : index
      %78 = vector.load %arg7[%c0_33, %c0_34] : memref<8x128xf32, #tpu.memory_space<vmem>>, vector<8x128xf32>
      tpu.vector_store %arg7[%c0_33, %c0_34], %77 {strides = array<i32>} : memref<8x128xf32, #tpu.memory_space<vmem>>, vector<8x128xf32>,
    } else {
    }
    %c0_i32_6 = arith.constant 0 : i32
    %14 = arith.cmpi eq, %arg1, %c0_i32_6 : i32
    %15 = arith.extui %14 : i1 to i32
    %c0_i32_7 = arith.constant 0 : i32
    %16 = arith.cmpi ne, %15, %c0_i32_7 : i32
    scf.if %16 {
      %c0 = arith.constant 0 : index
      %c0_8 = arith.constant 0 : index
      %17 = vector.load %arg5[%c0, %c0_8] : memref<8x128xf32, #tpu.memory_space<vmem>>, vector<8x128xf32>
      %c0_9 = arith.constant 0 : index
      %c0_10 = arith.constant 0 : index
      %18 = vector.load %arg4[%c0_9, %c0_10] : memref<24x128xf32, #tpu.memory_space<vmem>>, vector<8x128xf32>
      tpu.vector_store %arg4[%c0_9, %c0_10], %17 {strides = array<i32>} : memref<24x128xf32, #tpu.memory_space<vmem>>, vector<8x128xf32>,
      %c0_11 = arith.constant 0 : index
      %c0_12 = arith.constant 0 : index
      %19 = vector.load %arg6[%c0_11, %c0_12] : memref<8x128xf32, #tpu.memory_space<vmem>>, vector<8x128xf32>
      %c8 = arith.constant 8 : index
      %c0_13 = arith.constant 0 : index
      %20 = vector.load %arg4[%c8, %c0_13] : memref<24x128xf32, #tpu.memory_space<vmem>>, vector<8x128xf32>
      tpu.vector_store %arg4[%c8, %c0_13], %19 {strides = array<i32>} : memref<24x128xf32, #tpu.memory_space<vmem>>, vector<8x128xf32>,
      %c0_14 = arith.constant 0 : index
      %c0_15 = arith.constant 0 : index
      %21 = vector.load %arg7[%c0_14, %c0_15] : memref<8x128xf32, #tpu.memory_space<vmem>>, vector<8x128xf32>
      %c16 = arith.constant 16 : index
      %c0_16 = arith.constant 0 : index
      %22 = vector.load %arg4[%c16, %c0_16] : memref<24x128xf32, #tpu.memory_space<vmem>>, vector<8x128xf32>
      tpu.vector_store %arg4[%c16, %c0_16], %21 {strides = array<i32>} : memref<24x128xf32, #tpu.memory_space<vmem>>, vector<8x128xf32>,
    } else {
    }
    return
  }
  func.func @transform_0(%arg0: i32, %arg1: i32) -> (i32, i32) {
    %c1_i32 = arith.constant 1 : i32
    %0 = arith.muli %arg0, %c1_i32 : i32
    %1 = arith.addi %0, %arg1 : i32
    %c0_i32 = arith.constant 0 : i32
    %2 = arith.minsi %1, %c0_i32 : i32
    %c0_i32_0 = arith.constant 0 : i32
    %c0_i32_1 = arith.constant 0 : i32
    return %2, %c0_i32_0 : i32, i32
  }
  func.func @transform_1(%arg0: i32, %arg1: i32) -> (i32, i32) {
    %c1_i32 = arith.constant 1 : i32
    %0 = arith.muli %arg0, %c1_i32 : i32
    %1 = arith.addi %0, %arg1 : i32
    %c0_i32 = arith.constant 0 : i32
    %2 = arith.minsi %1, %c0_i32 : i32
    %c0_i32_0 = arith.constant 0 : i32
    %c0_i32_1 = arith.constant 0 : i32
    return %2, %c0_i32_0 : i32, i32
  }
  func.func @transform_2(%arg0: i32, %arg1: i32) -> (i32, i32) {
    %c0_i32 = arith.constant 0 : i32
    %c0_i32_0 = arith.constant 0 : i32
    return %arg0, %c0_i32 : i32, i32
  }
}

</mosaic_0001>

<llo_original>
// kernel: _dice_loss_impl.1
$region0: #{_dice_loss_impl.1}
  #allocation0 [shape = 'u32[]', space=smem, size = 0x4, offset = 0x4, fixed_abs, tag = 'smem constant byte address 0x4 - core index']
  #allocation1 [shape = 'u32[72,128]{1,0:T(1,128)}', space=vmem, size = 0x9000, scoped, tag = 'internal scratch']
  #allocation2 [shape = 'f32[8,128]{1,0:T(8,128)}', space=vmem, size = 0x1000, scoped, tag = 'scratch operand']
  #allocation3 [shape = 'f32[8,128]{1,0:T(8,128)}', space=vmem, size = 0x1000, scoped, tag = 'scratch operand']
  #allocation4 [shape = 'f32[8,128]{1,0:T(8,128)}', space=vmem, size = 0x1000, scoped, tag = 'scratch operand']
  %s0 = inlined_call_operand.vmem [shape: f32[16,128], index: 0, kind: input, shape index: {}]
  %s1 = inlined_call_operand.vmem [shape: bf16[16,128], index: 1, kind: input, shape index: {}]
  %s2 = inlined_call_operand.vmem [shape: f32[24,128], index: 2, kind: output, shape index: {}]
  %s3 = sld [smem:[#allocation0]]
  $region34: #{_dice_loss_impl.1} parent=0
    _
  %s5 = ssub.s32 1, %s3
  %s6 = scalar_select 0, %s5, %s3
  // Predicated region
  $region2: #{_dice_loss_impl.1} parent=0 // pred_check
    _
  $region3: #{_dice_loss_impl.1} parent=0 // pred_check_branch
    %8 = sbr.rel (0) target = $region5
  $region4: #{_dice_loss_impl.1} parent=0 // pred_region
    %s9 = sadd.s32 0, 0
    %p10 = scmp.lt.s32.totalorder %s9, 0
    %s11 = scalar_select %p10, %s9, 0
    %s12 = smul.u32 2, %s11
    %p13 = scmp.lt.s32.totalorder %s12, 1
    %s14 = scalar_select %p13, %s12, 1
    %s15 = smul.addr %s14, 8
    %s16 = scalar_lea.vmem %s0, %s15
    %s17 = sadd.s32 0, 0
    %p18 = scmp.lt.s32.totalorder %s17, 0
    %s19 = scalar_select %p18, %s17, 0
    %s20 = smul.u32 2, %s19
  $region5: #{_dice_loss_impl.1} parent=0 // pred_fallthru
    _
  // Predicated region
  $region6: #{_dice_loss_impl.1} parent=0 // pred_check
    _
  $region7: #{_dice_loss_impl.1} parent=0 // pred_check_branch
    %22 = sbr.rel (0) target = $region9
  $region8: #{_dice_loss_impl.1} parent=0 // pred_region
    %s23 = sadd.s32 0, 0
    %p24 = scmp.lt.s32.totalorder %s23, 0
    %s25 = scalar_select %p24, %s23, 0
    %s26 = smul.u32 2, %s25
    %p27 = scmp.lt.s32.totalorder %s26, 1
    %s28 = scalar_select %p27, %s26, 1
    %s29 = smul.addr %s28, 4
    %s30 = scalar_lea.vmem %s1, %s29
    %s31 = sadd.s32 0, 0
    %p32 = scmp.lt.s32.totalorder %s31, 0
    %s33 = scalar_select %p32, %s31, 0
    %s34 = smul.u32 2, %s33
  $region9: #{_dice_loss_impl.1} parent=0 // pred_fallthru
    _
  %s35 = sadd.s32 0, 0
  %p36 = scmp.lt.s32.totalorder %s35, 0
  %s37 = scalar_select %p36, %s35, 0
  %s38 = smul.u32 2, %s37
  %p39 = scmp.lt.s32.totalorder %s38, 1
  %s40 = scalar_select %p39, %s38, 1
  %s41 = smul.addr %s40, 8
  %s42 = scalar_lea.vmem %s0, %s41
  %s43 = sadd.s32 0, 0
  %p44 = scmp.lt.s32.totalorder %s43, 0
  %s45 = scalar_select %p44, %s43, 0
  %s46 = smul.u32 2, %s45
  %p47 = scmp.lt.s32.totalorder %s46, 1
  %s48 = scalar_select %p47, %s46, 1
  %s49 = smul.addr %s48, 4
  %s50 = scalar_lea.vmem %s1, %s49
  %s51 = sadd.s32 0, 0
  %p52 = scmp.lt.s32.totalorder %s51, 0
  %s53 = scalar_select %p52, %s51, 0
  %s54 = smul.u32 2, %s53
  %p55 = scmp.lt.s32.totalorder %s54, 1
  %s56 = scalar_select %p55, %s54, 1
  %s57 = smul.addr %s56, 8
  %s58 = scalar_lea.vmem %s0, %s57
  %s59 = sadd.s32 0, 0
  %p60 = scmp.lt.s32.totalorder %s59, 0
  %s61 = scalar_select %p60, %s59, 0
  %s62 = smul.u32 2, %s61
  %s63 = sadd.s32 0, 0
  %p64 = scmp.lt.s32.totalorder %s63, 0
  %s65 = scalar_select %p64, %s63, 0
  %s66 = smul.u32 2, %s65
  %p67 = scmp.lt.s32.totalorder %s66, 1
  %s68 = scalar_select %p67, %s66, 1
  %s69 = smul.addr %s68, 4
  %s70 = scalar_lea.vmem %s1, %s69
  %s71 = sadd.s32 0, 0
  %p72 = scmp.lt.s32.totalorder %s71, 0
  %s73 = scalar_select %p72, %s71, 0
  %s74 = smul.u32 2, %s73
  %p75 = scmp.eq.s32.totalorder 0, 0
  // Predicated region
  $region10: #{_dice_loss_impl.1} parent=0 // pred_check
    %p76 = pneg %p75
  $region11: #{_dice_loss_impl.1} parent=0 // pred_check_branch
    %78 = sbr.rel (%p76) target = $region13
  $region12: #{_dice_loss_impl.1} parent=0 // pred_region
    %79 = vst [vmem:[#allocation2] sm:$0xff] 0.0
    %80 = vst [vmem:[#allocation3] sm:$0xff] 0.0
    %81 = vst [vmem:[#allocation4] sm:$0xff] 0.0
  $region13: #{_dice_loss_impl.1} parent=0 // pred_fallthru
    _
  %s82 = sadd.s32 0, 0
  %s83 = smul.u32 %s82, 2048
  %s84 = sadd.s32 %s83, 2048
  %p85 = scmp.le.s32.totalorder %s84, 2048
  // Predicated region
  $region14: #{_dice_loss_impl.1} parent=0 // pred_check
    %p86 = pneg %p85
  $region15: #{_dice_loss_impl.1} parent=0 // pred_check_branch
    %88 = sbr.rel (%p86) target = $region17
  $region16: #{_dice_loss_impl.1} parent=0 // pred_region
    %v89 = vld [vmem:[%s58] sm:$0xff]
    %v90 = vld [vmem:[%s70] sm:$0xf]
    %v91 = vunpack.c.l.bf16 %v90
    %v92 = vmul.f32 %v89, 0.5
    %v93 = vtanh.pop %v92
    %v94 = vmul.f32 %v93, %v91
    %v95 = vadd.f32 %v94, 0.0
    %v96 = vadd.f32 %v93, 0.0
    %v97 = vadd.f32 %v91, 0.0
    %s98 = scalar_lea.vmem %s58, 8
    %v99 = vld [vmem:[%s98] sm:$0xff]
    %s100 = scalar_lea.vmem %s70, 4
    %v101 = vld [vmem:[%s100] sm:$0xf]
    %v102 = vunpack.c.l.bf16 %v101
    %v103 = vmul.f32 %v99, 0.5
    %v104 = vtanh.pop %v103
    %v105 = vmul.f32 %v104, %v102
    %v106 = vadd.f32 %v95, %v105
    %v107 = vadd.f32 %v96, %v104
    %v108 = vadd.f32 %v97, %v102
    %v109 = vld [vmem:[#allocation2] sm:$0xff]
    %v110 = vadd.f32 %v109, %v106
    %111 = vst [vmem:[#allocation2] sm:$0xff] %v110
    %v112 = vld [vmem:[#allocation3] sm:$0xff]
    %v113 = vadd.f32 %v112, %v107
    %114 = vst [vmem:[#allocation3] sm:$0xff] %v113
    %v115 = vld [vmem:[#allocation4] sm:$0xff]
    %v116 = vadd.f32 %v115, %v108
    %117 = vst [vmem:[#allocation4] sm:$0xff] %v116
  $region17: #{_dice_loss_impl.1} parent=0 // pred_fallthru
    _
  %p118 = scmp.gt.s32.totalorder %s84, 2048
  // Predicated region
  $region18: #{_dice_loss_impl.1} parent=0 // pred_check
    %p119 = pneg %p118
  $region19: #{_dice_loss_impl.1} parent=0 // pred_check_branch
    %121 = sbr.rel (%p119) target = $region21
  $region20: #{_dice_loss_impl.1} parent=0 // pred_region
    %v122 = vlaneseq
    %v123 = vshrl.u32 %v122, 7
    %v124 = vlaneseq
    %v125 = vand.u32 %v124, 127
    %v126 = vmul.u32 %v123, 128
    %v127 = vstv %s83
    %v128 = vadd.s32 %v127, %v126
    %v129 = vadd.s32 %v128, %v125
    %vm130 = vcmp.lt.s32.totalorder %v129, 2048
    %v131 = vld [vmem:[%s58] sm:$0xff]
    %v132 = vld [vmem:[%s70] sm:$0xf]
    %v133 = vunpack.c.l.bf16 %v132
    %v134 = vmul.f32 %v131, 0.5
    %v135 = vtanh.pop %v134
    %v136 = vsel %vm130, %v135, 0.0
    %v137 = vsel %vm130, %v133, 0.0
    %v138 = vmul.f32 %v136, %v137
    %v139 = vadd.f32 %v138, 0.0
    %v140 = vadd.f32 %v136, 0.0
    %v141 = vadd.f32 %v137, 0.0
    %v142 = vadd.s32 %v129, 1024
    %vm143 = vcmp.lt.s32.totalorder %v142, 2048
    %s144 = scalar_lea.vmem %s58, 8
    %v145 = vld [vmem:[%s144] sm:$0xff]
    %s146 = scalar_lea.vmem %s70, 4
    %v147 = vld [vmem:[%s146] sm:$0xf]
    %v148 = vunpack.c.l.bf16 %v147
    %v149 = vmul.f32 %v145, 0.5
    %v150 = vtanh.pop %v149
    %v151 = vsel %vm143, %v150, 0.0
    %v152 = vsel %vm143, %v148, 0.0
    %v153 = vmul.f32 %v151, %v152
    %v154 = vadd.f32 %v139, %v153
    %v155 = vadd.f32 %v140, %v151
    %v156 = vadd.f32 %v141, %v152
    %v157 = vld [vmem:[#allocation2] sm:$0xff]
    %v158 = vadd.f32 %v157, %v154
    %159 = vst [vmem:[#allocation2] sm:$0xff] %v158
    %v160 = vld [vmem:[#allocation3] sm:$0xff]
    %v161 = vadd.f32 %v160, %v155
    %162 = vst [vmem:[#allocation3] sm:$0xff] %v161
    %v163 = vld [vmem:[#allocation4] sm:$0xff]
    %v164 = vadd.f32 %v163, %v156
    %165 = vst [vmem:[#allocation4] sm:$0xff] %v164
  $region21: #{_dice_loss_impl.1} parent=0 // pred_fallthru
    _
  // Predicated region
  $region22: #{_dice_loss_impl.1} parent=0 // pred_check
    %p166 = pneg %p75
  $region23: #{_dice_loss_impl.1} parent=0 // pred_check_branch
    %168 = sbr.rel (%p166) target = $region25
  $region24: #{_dice_loss_impl.1} parent=0 // pred_region
    %v169 = vld [vmem:[#allocation2] sm:$0xff]
    %170 = vst [vmem:[%s2] sm:$0xff] %v169
    %v171 = vld [vmem:[#allocation3] sm:$0xff]
    %172 = vst [vmem:[%s2 + $0x8] sm:$0xff] %v171
    %v173 = vld [vmem:[#allocation4] sm:$0xff]
    %174 = vst [vmem:[%s2 + $0x10] sm:$0xff] %v173
  $region25: #{_dice_loss_impl.1} parent=0 // pred_fallthru
    _
  // Predicated region
  $region26: #{_dice_loss_impl.1} parent=0 // pred_check
    _
  $region27: #{_dice_loss_impl.1} parent=0 // pred_check_branch
    %176 = sbr.rel (0) target = $region29
  $region28: #{_dice_loss_impl.1} parent=0 // pred_region
    _
  $region29: #{_dice_loss_impl.1} parent=0 // pred_fallthru
    _
  // Predicated region
  $region30: #{_dice_loss_impl.1} parent=0 // pred_check
    _
  $region31: #{_dice_loss_impl.1} parent=0 // pred_check_branch
    %178 = sbr.rel (0) target = $region33
  $region32: #{_dice_loss_impl.1} parent=0 // pred_region
    _
  $region33: #{_dice_loss_impl.1} parent=0 // pred_fallthru
    _

</llo_original>
